<compile_context>
chip_gen: v7x
topology: tpu7x:2x2x1
jax: 0.10.0
libtpu: 0.0.40
codegen_flags: <defaults>
</compile_context>

<pallas_src>
import functools
import math

import jax
import jax.numpy as jnp
from jax.experimental import pallas as pl
from jax.experimental.pallas import tpu as pltpu

_LANES = 128          # lane width of a vreg (last dim)
_MAX_TILE_ROWS = 2048  # 2048 * 128 * 4 B = 1 MiB per block


def _erf(z):
    # Abramowitz & Stegun 7.1.26 rational approximation, |abs err| <= ~1.5e-7.
    # Not bit-exact vs. torch.erf, but within float32 round-off for this use.
    # Built only from ops guaranteed to lower in Mosaic (mul/add/exp/where).
    a1, a2, a3, a4, a5 = (0.254829592, -0.284496736, 1.421413741,
                          -1.453152027, 1.061405429)
    p = 0.3275911
    sign = jnp.where(z >= 0.0, 1.0, -1.0)
    za = jnp.abs(z)
    t = 1.0 / (1.0 + p * za)
    poly = ((((a5 * t + a4) * t + a3) * t + a2) * t + a1) * t
    return sign * (1.0 - poly * jnp.exp(-za * za))


def _gelu_exact(x):
    # Matches ReluOrGelu('gelu'): x * 0.5 * (1 + erf(x / sqrt(2)))
    return x * 0.5 * (1.0 + _erf(x * (1.0 / math.sqrt(2.0))))


def _activation_kernel(x_ref, o_ref, *, use_gelu):
    x = x_ref[...]
    if use_gelu:
        y = _gelu_exact(x.astype(jnp.float32))
    else:
        y = jnp.maximum(x, jnp.zeros_like(x))
    o_ref[...] = y.astype(o_ref.dtype)


def relu_or_gelu(x, activate_type: str):
    """Pallas implementation of ReluOrGelu.forward for any input shape."""
    if activate_type not in ("relu", "gelu"):
        raise ValueError(f"unknown activate_type: {activate_type}")
    use_gelu = activate_type == "gelu"

    orig_shape = x.shape
    orig_dtype = x.dtype
    n = int(x.size)

    # Lane-dense 2-D view: (rows, 128). Pad rows up to a multiple of the tile
    # so every grid step is a full, unmasked block (padding cost is bounded by
    # one tile and only exists when n is not already tile-aligned).
    rows = pl.cdiv(n, _LANES)
    tile_r = min(_MAX_TILE_ROWS, max(8, (rows // 8) * 8))
    padded_rows = pl.cdiv(rows, tile_r) * tile_r
    padded_n = padded_rows * _LANES

    flat = x.reshape(-1)
    if padded_n != n:
        flat = jnp.pad(flat, (0, padded_n - n))
    x2d = flat.reshape(padded_rows, _LANES)

    grid = (padded_rows // tile_r,)
    elem_bytes = jnp.dtype(orig_dtype).itemsize
    cost = pl.CostEstimate(
        flops=(12 if use_gelu else 1) * padded_n,
        transcendentals=(padded_n if use_gelu else 0),
        bytes_accessed=2 * padded_n * elem_bytes,
    )

    out2d = pl.pallas_call(
        functools.partial(_activation_kernel, use_gelu=use_gelu),
        grid=grid,
        in_specs=[pl.BlockSpec((tile_r, _LANES), lambda i: (i, 0))],
        out_specs=pl.BlockSpec((tile_r, _LANES), lambda i: (i, 0)),
        out_shape=jax.ShapeDtypeStruct((padded_rows, _LANES), orig_dtype),
        compiler_params=pltpu.CompilerParams(
            dimension_semantics=("parallel",)),
        cost_estimate=cost,
    )(x2d)

    return out2d.reshape(-1)[:n].reshape(orig_shape)


if __name__ == "__main__":
    key = jax.random.PRNGKey(0)
    x = jax.random.normal(key, (2, 4, 16, 16), jnp.float32)

    out_gelu = relu_or_gelu(x, "gelu")
    out_relu = relu_or_gelu(x, "relu")
    out_gelu = jax.block_until_ready(out_gelu)
    out_relu = jax.block_until_ready(out_relu)

    # Reference checks (host-side jnp).
    ref_gelu = x * 0.5 * (1.0 + jax.scipy.special.erf(x / math.sqrt(2.0)))
    ref_relu = jnp.maximum(x, 0.0)

    assert out_gelu.shape == x.shape and out_gelu.dtype == x.dtype
    assert out_relu.shape == x.shape and out_relu.dtype == x.dtype
    assert float(jnp.max(jnp.abs(out_gelu - ref_gelu))) < 1e-5
    assert float(jnp.max(jnp.abs(out_relu - ref_relu))) == 0.0
    print("KERNEL_OK")
</pallas_src>

<mosaic_0001>
module attributes {stable_mosaic.version = 11 : i64} {
  func.func @_activation_kernel(%arg0: i32, %arg1: memref<16x128xf32, #tpu.memory_space<vmem>>, %arg2: memref<16x128xf32, #tpu.memory_space<vmem>>) attributes {dimension_semantics = [#tpu.dimension_semantics<parallel>], iteration_bounds = array<i64: 1>, scalar_prefetch = 0 : i64, scratch_operands = 0 : i64, tpu.core_type = #tpu.core_type<tc>, window_params = [{transform_indices = @transform_0, window_bounds = array<i64: 16, 128>}, {transform_indices = @transform_1, window_bounds = array<i64: 16, 128>}]} {
    %c0 = arith.constant 0 : index
    %c0_0 = arith.constant 0 : index
    %0 = vector.load %arg1[%c0, %c0_0] : memref<16x128xf32, #tpu.memory_space<vmem>>, vector<16x128xf32>
    %cst = arith.constant 5.000000e-01 : f32
    %1 = vector.broadcast %cst : f32 to vector<16x128xf32>
    %2 = arith.mulf %0, %1 : vector<16x128xf32>
    %cst_1 = arith.constant 0.707106769 : f32
    %3 = vector.broadcast %cst_1 : f32 to vector<16x128xf32>
    %4 = arith.mulf %0, %3 : vector<16x128xf32>
    %cst_2 = arith.constant 0.000000e+00 : f32
    %5 = vector.broadcast %cst_2 : f32 to vector<16x128xf32>
    %6 = arith.cmpf oge, %4, %5 : vector<16x128xf32>
    %cst_3 = arith.constant 1.000000e+00 : f32
    %cst_4 = arith.constant -1.000000e+00 : f32
    %7 = vector.broadcast %cst_3 : f32 to vector<16x128xf32>
    %8 = vector.broadcast %cst_4 : f32 to vector<16x128xf32>
    %9 = arith.select %6, %7, %8 : vector<16x128xi1>, vector<16x128xf32>
    %10 = math.absf %4 : vector<16x128xf32>
    %cst_5 = arith.constant 0.327591091 : f32
    %11 = vector.broadcast %cst_5 : f32 to vector<16x128xf32>
    %12 = arith.mulf %11, %10 : vector<16x128xf32>
    %cst_6 = arith.constant 1.000000e+00 : f32
    %13 = vector.broadcast %cst_6 : f32 to vector<16x128xf32>
    %14 = arith.addf %13, %12 : vector<16x128xf32>
    %cst_7 = arith.constant 1.000000e+00 : f32
    %15 = vector.broadcast %cst_7 : f32 to vector<16x128xf32>
    %16 = arith.divf %15, %14 : vector<16x128xf32>
    %cst_8 = arith.constant 1.06140542 : f32
    %17 = vector.broadcast %cst_8 : f32 to vector<16x128xf32>
    %18 = arith.mulf %17, %16 : vector<16x128xf32>
    %cst_9 = arith.constant -1.45315206 : f32
    %19 = vector.broadcast %cst_9 : f32 to vector<16x128xf32>
    %20 = arith.addf %18, %19 : vector<16x128xf32>
    %21 = arith.mulf %20, %16 : vector<16x128xf32>
    %cst_10 = arith.constant 1.42141378 : f32
    %22 = vector.broadcast %cst_10 : f32 to vector<16x128xf32>
    %23 = arith.addf %21, %22 : vector<16x128xf32>
    %24 = arith.mulf %23, %16 : vector<16x128xf32>
    %cst_11 = arith.constant -0.284496725 : f32
    %25 = vector.broadcast %cst_11 : f32 to vector<16x128xf32>
    %26 = arith.addf %24, %25 : vector<16x128xf32>
    %27 = arith.mulf %26, %16 : vector<16x128xf32>
    %cst_12 = arith.constant 0.254829586 : f32
    %28 = vector.broadcast %cst_12 : f32 to vector<16x128xf32>
    %29 = arith.addf %27, %28 : vector<16x128xf32>
    %30 = arith.mulf %29, %16 : vector<16x128xf32>
    %cst_13 = arith.constant 0.000000e+00 : f32
    %31 = vector.broadcast %cst_13 : f32 to vector<16x128xf32>
    %32 = arith.subf %31, %10 : vector<16x128xf32>
    %33 = arith.mulf %32, %10 : vector<16x128xf32>
    %34 = math.exp %33 : vector<16x128xf32>
    %35 = arith.mulf %30, %34 : vector<16x128xf32>
    %cst_14 = arith.constant 1.000000e+00 : f32
    %36 = vector.broadcast %cst_14 : f32 to vector<16x128xf32>
    %37 = arith.subf %36, %35 : vector<16x128xf32>
    %38 = arith.mulf %9, %37 : vector<16x128xf32>
    %cst_15 = arith.constant 1.000000e+00 : f32
    %39 = vector.broadcast %cst_15 : f32 to vector<16x128xf32>
    %40 = arith.addf %39, %38 : vector<16x128xf32>
    %41 = arith.mulf %2, %40 : vector<16x128xf32>
    %c0_16 = arith.constant 0 : index
    %c0_17 = arith.constant 0 : index
    %42 = vector.load %arg2[%c0_16, %c0_17] : memref<16x128xf32, #tpu.memory_space<vmem>>, vector<16x128xf32>
    tpu.vector_store %arg2[%c0_16, %c0_17], %41 {strides = array<i32>} : memref<16x128xf32, #tpu.memory_space<vmem>>, vector<16x128xf32>,
    return
  }
  func.func @transform_0(%arg0: i32) -> (i32, i32) {
    %c0_i32 = arith.constant 0 : i32
    %c0_i32_0 = arith.constant 0 : i32
    return %arg0, %c0_i32 : i32, i32
  }
  func.func @transform_1(%arg0: i32) -> (i32, i32) {
    %c0_i32 = arith.constant 0 : i32
    %c0_i32_0 = arith.constant 0 : i32
    return %arg0, %c0_i32 : i32, i32
  }
}

</mosaic_0001>

<llo_original>
// kernel: tpu_custom_call.1
$region0: #{tpu_custom_call.1}
  #allocation0 [shape = 'u32[]', space=smem, size = 0x4, offset = 0x4, fixed_abs, tag = 'smem constant byte address 0x4 - core index']
  #allocation1 [shape = 'u32[144,128]{1,0:T(1,128)}', space=vmem, size = 0x12000, scoped, tag = 'internal scratch']
  %s0 = inlined_call_operand.hbm [shape: f32[16,128], index: 0, kind: input, shape index: {}]
  %s1 = inlined_call_operand.hbm [shape: f32[16,128], index: 1, kind: output, shape index: {}]
  %s2 = sld [smem:[#allocation0]]
  $region18: #{tpu_custom_call.1} parent=0
    _
  %s4 = ssub.s32 1, %s2
  %s5 = scalar_select 0, %s4, %s2
  $region1: #{tpu_custom_call.1} parent=0
    #allocation2 [shape = 'u8[8192]{0}', space=vmem, size = 0x2000, scoped, tag = 'input window, operand 0, single buffered']
    #allocation3 [shape = 's32[1]{0}', space=sflag, size = 0x4, scoped, tag = 'scoped memory for tpu_custom_call.1']
    #allocation4 [shape = 's32[1]{0}', space=sflag, size = 0x4, scoped, tag = 'scoped memory for tpu_custom_call.1']
    #allocation5 [shape = 'u8[8192]{0}', space=vmem, size = 0x2000, scoped, tag = 'output window, operand 0, single buffered']
    %6 = vsyncpa [#allocation3], 0
    %7 = vsyncpa [#allocation4], 0
    // Predicated region
    $region2: #{tpu_custom_call.1} parent=1 // pred_check
      _
    $region3: #{tpu_custom_call.1} parent=1 // pred_check_branch
      %9 = sbr.rel (0) target = $region5
    $region4: #{tpu_custom_call.1} parent=1 // pred_region
      %s11 = ssub.s32 256, 256
      %12 = vsyncadd [#allocation3], %s11
      %s13 = sshll.u32 [#allocation2], 4
      %s14 = int_to_ptr.vmem [resolvable:$true] %s13
      %19 = dma.hbm_to_vmem [thread:$0]  %s0, 256, %s14, [#allocation3], 128, 128, 8
    $region5: #{tpu_custom_call.1} parent=1 // pred_fallthru
      _
    // Predicated region
    $region6: #{tpu_custom_call.1} parent=1 // pred_check
      _
    $region7: #{tpu_custom_call.1} parent=1 // pred_check_branch
      %21 = sbr.rel (0) target = $region9
    $region8: #{tpu_custom_call.1} parent=1 // pred_region
      %22 = dma.done [#allocation3], 256
    $region9: #{tpu_custom_call.1} parent=1 // pred_fallthru
      _
    %v23 = vld [vmem:[#allocation2] sm:$0xff]
    %v24 = vld [vmem:[#allocation2 + $0x8] sm:$0xff]
    %v25 = vmul.f32 %v23, 0.5
    %v26 = vmul.f32 %v24, 0.5
    %v27 = vmul.f32 %v23, 0.70710677
    %v28 = vmul.f32 %v24, 0.70710677
    %vm29 = vcmp.ge.f32.partialorder %v27, 0.0
    %vm30 = vcmp.ge.f32.partialorder %v28, 0.0
    %v31 = vsel %vm29, 1.0, -1.0
    %v32 = vsel %vm30, 1.0, -1.0
    %v33 = vand.u32 2147483647, %v27
    %v34 = vand.u32 2147483647, %v28
    %v35 = vmul.f32 %v33, 0.3275911
    %v36 = vmul.f32 %v34, 0.3275911
    %v37 = vadd.f32 %v35, 1.0
    %v38 = vadd.f32 %v36, 1.0
    %v39 = vrcp.pop %v37
    %v40 = vmul.f32 1.0, %v39
    %v41 = vrcp.pop %v38
    %v42 = vmul.f32 1.0, %v41
    %v43 = vmul.f32 %v40, 1.0614054
    %v44 = vmul.f32 %v42, 1.0614054
    %v45 = vadd.f32 %v43, -1.4531521
    %v46 = vadd.f32 %v44, -1.4531521
    %v47 = vmul.f32 %v45, %v40
    %v48 = vmul.f32 %v46, %v42
    %v49 = vadd.f32 %v47, 1.4214138
    %v50 = vadd.f32 %v48, 1.4214138
    %v51 = vmul.f32 %v49, %v40
    %v52 = vmul.f32 %v50, %v42
    %v53 = vadd.f32 %v51, -0.28449672
    %v54 = vadd.f32 %v52, -0.28449672
    %v55 = vmul.f32 %v53, %v40
    %v56 = vmul.f32 %v54, %v42
    %v57 = vadd.f32 %v55, 0.2548296
    %v58 = vadd.f32 %v56, 0.2548296
    %v59 = vmul.f32 %v57, %v40
    %v60 = vmul.f32 %v58, %v42
    %v61 = vsub.f32 0.0, %v33
    %v62 = vsub.f32 0.0, %v34
    %v63 = vmul.f32 %v61, %v33
    %v64 = vmul.f32 %v62, %v34
    %v65 = vmul.f32 %v63, 1.442695
    %v66 = vpow.pop %v65
    %v67 = vmul.f32 %v64, 1.442695
    %v68 = vpow.pop %v67
    %v69 = vmul.f32 %v59, %v66
    %v70 = vmul.f32 %v60, %v68
    %v71 = vsub.f32 1.0, %v69
    %v72 = vsub.f32 1.0, %v70
    %v73 = vmul.f32 %v31, %v71
    %v74 = vmul.f32 %v32, %v72
    %v75 = vadd.f32 %v73, 1.0
    %v76 = vadd.f32 %v74, 1.0
    %v77 = vmul.f32 %v25, %v75
    %v78 = vmul.f32 %v26, %v76
    %79 = vst [vmem:[#allocation5] sm:$0xff] %v77
    %80 = vst [vmem:[#allocation5 + $0x8] sm:$0xff] %v78
    // Predicated region
    $region10: #{tpu_custom_call.1} parent=1 // pred_check
      _
    $region11: #{tpu_custom_call.1} parent=1 // pred_check_branch
      %82 = sbr.rel (0) target = $region13
    $region12: #{tpu_custom_call.1} parent=1 // pred_region
      %s84 = ssub.s32 256, 256
      %85 = vsyncadd [#allocation4], %s84
      %s86 = sshll.u32 [#allocation5], 4
      %s87 = int_to_ptr.vmem [resolvable:$true] %s86
      %92 = dma.vmem_to_hbm [thread:$0]  %s87, 256, %s1, [#allocation4], 128, 128, 8
    $region13: #{tpu_custom_call.1} parent=1 // pred_fallthru
      _
    // Predicated region
    $region14: #{tpu_custom_call.1} parent=1 // pred_check
      _
    $region15: #{tpu_custom_call.1} parent=1 // pred_check_branch
      %94 = sbr.rel (0) target = $region17
    $region16: #{tpu_custom_call.1} parent=1 // pred_region
      %95 = dma.done [#allocation4], 256
    $region17: #{tpu_custom_call.1} parent=1 // pred_fallthru
      _
    %96 = vsyncpa [#allocation3], 1
    %97 = vsyncpa [#allocation4], 1

</llo_original>
